<compile_context>
chip_gen: v7x
topology: tpu7x:2x2x1
jax: 0.10.0
libtpu: 0.0.40
codegen_flags: <defaults>
</compile_context>

<pallas_src>
import functools

import jax
import jax.numpy as jnp
from jax.experimental import pallas as pl
from jax.experimental.pallas import tpu as pltpu


def _int_pow(x, p):
    """x**p for a static non-negative integer p (exponentiation by squaring,
    pure VPU multiplies -- keeps the EUP slot free for the softmax exp)."""
    result = None
    base = x
    while p > 0:
        if p & 1:
            result = base if result is None else result * base
        p >>= 1
        if p:
            base = base * base
    return jnp.ones_like(x) if result is None else result


def _focal_loss_kernel(x_ref, t_ref, a_ref, o_ref, *, gamma):
    x = x_ref[...].astype(jnp.float32)          # (C, TILE_N) logits
    t = t_ref[...]                              # (1, TILE_N) int32 targets
    a_t = a_ref[...].astype(jnp.float32)        # (1, TILE_N) alpha[target]

    c, tn = x.shape

    # numerically stable log-softmax pieces; class reductions over sublanes
    m = jnp.max(x, axis=0, keepdims=True)                       # (1, TILE_N)
    s = jnp.sum(jnp.exp(x - m), axis=0, keepdims=True)          # (1, TILE_N)

    # x_t = logit of the target class (one-hot masked sublane reduction,
    # equivalent of scatter_(1, ids, 1.0) followed by (P*mask).sum(1))
    cls_ids = jax.lax.broadcasted_iota(jnp.int32, (c, tn), 0)
    onehot = (cls_ids == t).astype(jnp.float32)                 # (C, TILE_N)
    x_t = jnp.sum(x * onehot, axis=0, keepdims=True)            # (1, TILE_N)

    log_p = (x_t - m) - jnp.log(s)                              # log p_t <= 0
    p_t = jnp.exp(log_p)
    one_minus = jnp.maximum(1.0 - p_t, 0.0)                     # guard rounding

    if float(gamma).is_integer() and gamma >= 0:
        focal = _int_pow(one_minus, int(gamma))
    else:
        focal = jnp.power(one_minus, jnp.float32(gamma))

    loss = -a_t * focal * log_p                                 # (1, TILE_N)

    # one partial sum per grid step; padded samples have a_t == 0 -> exactly 0
    o_ref[...] = jnp.full((1, 1, 1), jnp.sum(loss), dtype=jnp.float32)


def _choose_tile_n(n, c):
    """Lane-axis batch tile: multiple of 128, double-buffered f32 logits block
    kept well under every generation's default scoped VMEM."""
    c_sub = max(8, ((c + 7) // 8) * 8)          # sublane-padded class count
    budget = 4 * 1024 * 1024                    # bytes for the logits buffers
    t = budget // (2 * c_sub * 4)
    t = max(128, (t // 128) * 128)
    return min(t, 2048)


def focal_loss(inputs, targets, alpha, *, gamma=5, size_average=True):
    """inputs: (N, C) float logits; targets: (N,) int; alpha: (C,) or (C, 1)."""
    n, c = inputs.shape

    # per-sample alpha gathered outside the kernel (tiny XLA gather)
    targets = targets.astype(jnp.int32)
    a_t = jnp.reshape(alpha, (-1,)).astype(jnp.float32)[targets]        # (N,)

    tile_n = _choose_tile_n(n, c)
    if n <= tile_n:
        tile_n = n
        n_pad = n
    else:
        n_pad = ((n + tile_n - 1) // tile_n) * tile_n
    grid = n_pad // tile_n

    # classes -> sublanes, samples -> lanes (lane-dense even for small C)
    x_cn = jnp.transpose(inputs.astype(jnp.float32))                    # (C, N)
    if n_pad != n:
        pad = n_pad - n
        x_cn = jnp.pad(x_cn, ((0, 0), (0, pad)))
        targets = jnp.pad(targets, (0, pad))
        a_t = jnp.pad(a_t, (0, pad))     # alpha = 0 -> padded rows add 0 loss

    t2d = targets.reshape(1, n_pad)
    a2d = a_t.reshape(1, n_pad)

    kernel = functools.partial(_focal_loss_kernel, gamma=gamma)

    partials = pl.pallas_call(
        kernel,
        out_shape=jax.ShapeDtypeStruct((grid, 1, 1), jnp.float32),
        grid_spec=pltpu.PrefetchScalarGridSpec(
            num_scalar_prefetch=0,
            grid=(grid,),
            in_specs=[
                pl.BlockSpec((c, tile_n), lambda i: (0, i)),
                pl.BlockSpec((1, tile_n), lambda i: (0, i)),
                pl.BlockSpec((1, tile_n), lambda i: (0, i)),
            ],
            out_specs=pl.BlockSpec((1, 1, 1), lambda i: (i, 0, 0)),
        ),
        compiler_params=pltpu.CompilerParams(
            dimension_semantics=("parallel",),
        ),
        cost_estimate=pl.CostEstimate(
            flops=10 * n_pad * c,
            transcendentals=n_pad * (c + 2),
            bytes_accessed=n_pad * c * 4 + n_pad * 8 + grid * 4,
        ),
    )(x_cn, t2d, a2d)

    total = jnp.sum(partials)
    if size_average:
        total = total / jnp.float32(n)
    return total


if __name__ == "__main__":
    class_num = 8
    n = 8

    key = jax.random.PRNGKey(0)
    k_x, k_t = jax.random.split(key)

    logits = jax.random.normal(k_x, (n, class_num), dtype=jnp.float32)
    targets = jax.random.randint(k_t, (n,), 0, class_num, dtype=jnp.int32)
    # FocalLoss.__init__ with alpha=None -> torch.ones(class_num, 1)
    alpha = jnp.ones((class_num,), dtype=jnp.float32)

    loss = focal_loss(logits, targets, alpha, gamma=5, size_average=True)
    jax.block_until_ready(loss)

    # pure-JAX reference check
    p = jax.nn.softmax(logits, axis=1)
    p_t = p[jnp.arange(n), targets]
    a_ref = alpha[targets]
    ref = jnp.mean(-a_ref * (1.0 - p_t) ** 5 * jnp.log(p_t))
    assert jnp.allclose(loss, ref, rtol=1e-5, atol=1e-6), (loss, ref)

    print("KERNEL_OK")
</pallas_src>

<mosaic_0001>
module attributes {stable_mosaic.version = 11 : i64} {
  func.func @_focal_loss_kernel(%arg0: i32, %arg1: memref<8x8xf32, #tpu.memory_space<vmem>>, %arg2: memref<1x8xi32, #tpu.memory_space<vmem>>, %arg3: memref<1x8xf32, #tpu.memory_space<vmem>>, %arg4: memref<1x1x1xf32, #tpu.memory_space<vmem>>) attributes {dimension_semantics = [#tpu.dimension_semantics<parallel>], iteration_bounds = array<i64: 1>, scalar_prefetch = 0 : i64, scratch_operands = 0 : i64, tpu.core_type = #tpu.core_type<tc>, window_params = [{transform_indices = @transform_0, window_bounds = array<i64: 8, 8>}, {transform_indices = @transform_1, window_bounds = array<i64: 1, 8>}, {transform_indices = @transform_2, window_bounds = array<i64: 1, 8>}, {transform_indices = @transform_3, window_bounds = array<i64: 1, 1, 1>}]} {
    %c0 = arith.constant 0 : index
    %c0_0 = arith.constant 0 : index
    %0 = vector.load %arg1[%c0, %c0_0] : memref<8x8xf32, #tpu.memory_space<vmem>>, vector<8x8xf32>
    %c0_1 = arith.constant 0 : index
    %c0_2 = arith.constant 0 : index
    %1 = vector.load %arg2[%c0_1, %c0_2] : memref<1x8xi32, #tpu.memory_space<vmem>>, vector<1x8xi32>
    %c0_3 = arith.constant 0 : index
    %c0_4 = arith.constant 0 : index
    %2 = vector.load %arg3[%c0_3, %c0_4] : memref<1x8xf32, #tpu.memory_space<vmem>>, vector<1x8xf32>
    %cst = arith.constant dense<0xFF800000> : vector<8xf32>
    %3 = vector.multi_reduction <maximumf>, %0, %cst [0] : vector<8x8xf32> to vector<8xf32>
    %4 = vector.shape_cast %3 : vector<8xf32> to vector<1x8xf32>
    %5 = vector.broadcast %4 : vector<1x8xf32> to vector<8x8xf32>
    %6 = arith.subf %0, %5 : vector<8x8xf32>
    %7 = math.exp %6 : vector<8x8xf32>
    %cst_5 = arith.constant dense<0.000000e+00> : vector<8xf32>
    %8 = vector.multi_reduction <add>, %7, %cst_5 [0] : vector<8x8xf32> to vector<8xf32>
    %9 = vector.shape_cast %8 : vector<8xf32> to vector<1x8xf32>
    %10 = tpu.iota {dimensions = array<i32: 0>} : vector<8x8xi32>
    %11 = vector.broadcast %1 : vector<1x8xi32> to vector<8x8xi32>
    %12 = arith.cmpi eq, %10, %11 : vector<8x8xi32>
    %13 = arith.extui %12 : vector<8x8xi1> to vector<8x8xi32>
    %14 = arith.sitofp %13 : vector<8x8xi32> to vector<8x8xf32>
    %15 = arith.mulf %0, %14 : vector<8x8xf32>
    %cst_6 = arith.constant dense<0.000000e+00> : vector<8xf32>
    %16 = vector.multi_reduction <add>, %15, %cst_6 [0] : vector<8x8xf32> to vector<8xf32>
    %17 = vector.shape_cast %16 : vector<8xf32> to vector<1x8xf32>
    %18 = arith.subf %17, %4 : vector<1x8xf32>
    %19 = math.log %9 : vector<1x8xf32>
    %20 = arith.subf %18, %19 : vector<1x8xf32>
    %21 = math.exp %20 : vector<1x8xf32>
    %cst_7 = arith.constant 1.000000e+00 : f32
    %22 = vector.broadcast %cst_7 : f32 to vector<1x8xf32>
    %23 = arith.subf %22, %21 : vector<1x8xf32>
    %cst_8 = arith.constant 0.000000e+00 : f32
    %24 = vector.broadcast %cst_8 : f32 to vector<1x8xf32>
    %25 = arith.maximumf %23, %24 : vector<1x8xf32>
    %26 = arith.mulf %25, %25 : vector<1x8xf32>
    %27 = arith.mulf %26, %26 : vector<1x8xf32>
    %28 = arith.mulf %25, %27 : vector<1x8xf32>
    %cst_9 = arith.constant 0.000000e+00 : f32
    %29 = vector.broadcast %cst_9 : f32 to vector<1x8xf32>
    %30 = arith.subf %29, %2 : vector<1x8xf32>
    %31 = arith.mulf %30, %28 : vector<1x8xf32>
    %32 = arith.mulf %31, %20 : vector<1x8xf32>
    %33 = vector.shape_cast %32 : vector<1x8xf32> to vector<1x1x8xf32>
    %cst_10 = arith.constant dense<0.000000e+00> : vector<1xf32>
    %34 = vector.multi_reduction <add>, %33, %cst_10 [1, 2] : vector<1x1x8xf32> to vector<1xf32>
    %35 = vector.shape_cast %34 : vector<1xf32> to vector<1x1x1xf32>
    %36 = vector.extract %35[0, 0, 0] : f32 from vector<1x1x1xf32>
    %37 = vector.broadcast %36 : f32 to vector<1x1x1xf32>
    %c0_11 = arith.constant 0 : index
    %c0_12 = arith.constant 0 : index
    %c0_13 = arith.constant 0 : index
    %38 = vector.load %arg4[%c0_11, %c0_12, %c0_13] : memref<1x1x1xf32, #tpu.memory_space<vmem>>, vector<1x1x1xf32>
    tpu.vector_store %arg4[%c0_11, %c0_12, %c0_13], %37 {strides = array<i32>} : memref<1x1x1xf32, #tpu.memory_space<vmem>>, vector<1x1x1xf32>,
    return
  }
  func.func @transform_0(%arg0: i32) -> (i32, i32) {
    %c0_i32 = arith.constant 0 : i32
    %c0_i32_0 = arith.constant 0 : i32
    return %c0_i32, %arg0 : i32, i32
  }
  func.func @transform_1(%arg0: i32) -> (i32, i32) {
    %c0_i32 = arith.constant 0 : i32
    %c0_i32_0 = arith.constant 0 : i32
    return %c0_i32, %arg0 : i32, i32
  }
  func.func @transform_2(%arg0: i32) -> (i32, i32) {
    %c0_i32 = arith.constant 0 : i32
    %c0_i32_0 = arith.constant 0 : i32
    return %c0_i32, %arg0 : i32, i32
  }
  func.func @transform_3(%arg0: i32) -> (i32, i32, i32) {
    %c0_i32 = arith.constant 0 : i32
    %c0_i32_0 = arith.constant 0 : i32
    %c0_i32_1 = arith.constant 0 : i32
    return %arg0, %c0_i32, %c0_i32_0 : i32, i32, i32
  }
}

</mosaic_0001>

<llo_original>
// kernel: tpu_custom_call.1
$region0: #{tpu_custom_call.1}
  #allocation0 [shape = 'u32[]', space=smem, size = 0x4, offset = 0x4, fixed_abs, tag = 'smem constant byte address 0x4 - core index']
  #allocation1 [shape = 'u32[144,128]{1,0:T(1,128)}', space=vmem, size = 0x12000, scoped, tag = 'internal scratch']
  %s0 = inlined_call_operand.hbm [shape: f32[8,8], index: 0, kind: input, shape index: {}]
  %s1 = inlined_call_operand.vmem [shape: s32[1,8], index: 1, kind: input, shape index: {}]
  %s2 = inlined_call_operand.vmem [shape: f32[1,8], index: 2, kind: input, shape index: {}]
  %s3 = inlined_call_operand.hbm [shape: f32[1,1,1], index: 3, kind: output, shape index: {}]
  %s4 = sld [smem:[#allocation0]]
  $region26: #{tpu_custom_call.1} parent=0
    _
  %s6 = ssub.s32 1, %s4
  %s7 = scalar_select 0, %s6, %s4
  $region1: #{tpu_custom_call.1} parent=0
    #allocation2 [shape = 'u8[4096]{0}', space=vmem, size = 0x1000, scoped, tag = 'input window, operand 0, single buffered']
    #allocation3 [shape = 's32[1]{0}', space=sflag, size = 0x4, scoped, tag = 'scoped memory for tpu_custom_call.1']
    #allocation4 [shape = 's32[1]{0}', space=sflag, size = 0x4, scoped, tag = 'scoped memory for tpu_custom_call.1']
    #allocation5 [shape = 'u8[512]{0}', space=vmem, size = 0x400, scoped, tag = 'output window, operand 0, single buffered']
    %8 = vsyncpa [#allocation3], 0
    %9 = vsyncpa [#allocation4], 0
    // Predicated region
    $region2: #{tpu_custom_call.1} parent=1 // pred_check
      _
    $region3: #{tpu_custom_call.1} parent=1 // pred_check_branch
      %11 = sbr.rel (0) target = $region5
    $region4: #{tpu_custom_call.1} parent=1 // pred_region
      %s13 = ssub.s32 128, 128
      %14 = vsyncadd [#allocation3], %s13
      %s16 = sshll.u32 [#allocation2], 4
      %s17 = int_to_ptr.vmem [resolvable:$true] %s16
      %19 = dma.hbm_to_vmem [thread:$0]  %s0, 128, %s17, [#allocation3]
    $region5: #{tpu_custom_call.1} parent=1 // pred_fallthru
      _
    // Predicated region
    $region6: #{tpu_custom_call.1} parent=1 // pred_check
      _
    $region7: #{tpu_custom_call.1} parent=1 // pred_check_branch
      %21 = sbr.rel (0) target = $region9
    $region8: #{tpu_custom_call.1} parent=1 // pred_region
      _
    $region9: #{tpu_custom_call.1} parent=1 // pred_fallthru
      _
    // Predicated region
    $region10: #{tpu_custom_call.1} parent=1 // pred_check
      _
    $region11: #{tpu_custom_call.1} parent=1 // pred_check_branch
      %23 = sbr.rel (0) target = $region13
    $region12: #{tpu_custom_call.1} parent=1 // pred_region
      _
    $region13: #{tpu_custom_call.1} parent=1 // pred_fallthru
      _
    // Predicated region
    $region14: #{tpu_custom_call.1} parent=1 // pred_check
      _
    $region15: #{tpu_custom_call.1} parent=1 // pred_check_branch
      %25 = sbr.rel (0) target = $region17
    $region16: #{tpu_custom_call.1} parent=1 // pred_region
      %26 = dma.done [#allocation3], 128
    $region17: #{tpu_custom_call.1} parent=1 // pred_fallthru
      _
    %v27 = vld [vmem:[#allocation2] sm:$0xff]
    %v28 = vld [vmem:[%s1] sm:$0x1]
    %v29 = vld [vmem:[%s2] sm:$0x1]
    %vm30 = vcmask 64512
    %v31 = vsel %vm30, %v27, -inf
    %v32 = vrot.slane %v31, 4
    %v33 = vmax.f32 %v31, %v32
    %v34 = vrot.slane %v33, 2
    %v35 = vmax.f32 %v33, %v34
    %v36 = vrot.slane %v35, 1
    %v37 = vmax.f32 %v35, %v36
    %v38 = vsub.f32 %v27, %v37
    %v39 = vmul.f32 %v38, 1.442695
    %v40 = vpow.pop %v39
    %v41 = vsel %vm30, %v40, 0.0
    %v42 = vrot.slane %v41, 4
    %v43 = vadd.f32 %v41, %v42
    %v44 = vrot.slane %v43, 2
    %v45 = vadd.f32 %v43, %v44
    %v46 = vrot.slane %v45, 1
    %v47 = vadd.f32 %v45, %v46
    %v48 = vlaneseq
    %v49 = vshrl.u32 %v48, 7
    %v50 = vlaneseq
    %v51 = vshrl.u32 %v50, 7
    %v52 = vsub.s32 0, %v51
    %v53 = vrot.slane %v28, %v52
    %vm54 = vcmp.eq.s32.totalorder %v49, %v53
    %v55 = vsel %vm54, 1, 0
    %v56 = vcvt.s32.f32 %v55
    %v57 = vmul.f32 %v27, %v56
    %v58 = vsel %vm30, %v57, 0.0
    %v59 = vrot.slane %v58, 4
    %v60 = vadd.f32 %v58, %v59
    %v61 = vrot.slane %v60, 2
    %v62 = vadd.f32 %v60, %v61
    %v63 = vrot.slane %v62, 1
    %v64 = vadd.f32 %v62, %v63
    %v65 = vsub.f32 %v64, %v37
    %v66 = vlog2.pop %v47
    %v67 = vmul.f32 %v66, 0.6931472
    %v68 = vsub.f32 %v65, %v67
    %v69 = vmul.f32 %v68, 1.442695
    %v70 = vpow.pop %v69
    %v71 = vsub.f32 1.0, %v70
    %v72 = vmax.f32 %v71, 0.0
    %v73 = vmul.f32 %v72, %v72
    %v74 = vmul.f32 %v73, %v73
    %v75 = vmul.f32 %v72, %v74
    %v76 = vsub.f32 0.0, %v29
    %v77 = vmul.f32 %v76, %v75
    %v78 = vmul.f32 %v77, %v68
    %vm79 = vcmask 57344
    %v80 = vsel %vm79, %v78, 0.0
    %81 = vadd.xlane.f32.xlu0 %v80
    %v82 = vpop.xlane.xlu0 %81
    %v83 = vrot.slane %v82, 4
    %v84 = vadd.f32 %v82, %v83
    %v85 = vrot.slane %v84, 2
    %v86 = vadd.f32 %v84, %v85
    %v87 = vrot.slane %v86, 1
    %v88 = vadd.f32 %v86, %v87
    %s89 = vtos %v88
    %v90 = vstv %s89
    %vm91 = vcmask 0
    %92 = vst.msk [vmem:[#allocation5] sm:$0x1] %vm91, %v90
    // Predicated region
    $region18: #{tpu_custom_call.1} parent=1 // pred_check
      _
    $region19: #{tpu_custom_call.1} parent=1 // pred_check_branch
      %94 = sbr.rel (0) target = $region21
    $region20: #{tpu_custom_call.1} parent=1 // pred_region
      %s96 = ssub.s32 16, 16
      %97 = vsyncadd [#allocation4], %s96
      %s99 = sshll.u32 [#allocation5], 4
      %s100 = int_to_ptr.vmem [resolvable:$true] %s99
      %102 = dma.vmem_to_hbm [thread:$0]  %s100, 16, %s3, [#allocation4]
    $region21: #{tpu_custom_call.1} parent=1 // pred_fallthru
      _
    // Predicated region
    $region22: #{tpu_custom_call.1} parent=1 // pred_check
      _
    $region23: #{tpu_custom_call.1} parent=1 // pred_check_branch
      %104 = sbr.rel (0) target = $region25
    $region24: #{tpu_custom_call.1} parent=1 // pred_region
      %105 = dma.done [#allocation4], 16
    $region25: #{tpu_custom_call.1} parent=1 // pred_fallthru
      _
    %106 = vsyncpa [#allocation3], 1
    %107 = vsyncpa [#allocation4], 1

</llo_original>
